<compile_context>
chip_gen: v6e
topology: v6e:2x2x1
jax: 0.10.0
libtpu: 0.0.40
codegen_flags: <defaults>
</compile_context>

<pallas_src>
import jax
import jax.numpy as jnp
from jax.experimental import pallas as pl
from jax.experimental.pallas import tpu as pltpu

_LANE = 128   # lane width (last dim)
_SUBLANE = 8  # f32 sublane width (second-last dim)


def _round_up(n: int, m: int) -> int:
    return (n + m - 1) // m * m


def _irisnet_kernel(x_ref, w1_ref, b1_ref, w2_ref, b2_ref, out_ref):
    """out = relu(x @ W1 + b1) @ W2 + b2 for one (tb, D_in) batch tile.

    Only the hidden dim is padded (to 128, done once at init); D_in and D_out
    stay at their true widths via the full-dim BlockSpec exception. Weights
    and biases are VMEM-resident across the whole grid (their BlockSpecs
    return the same block every step), so only the activation tile and the
    small output tile move per grid step.
    """
    h = jnp.dot(x_ref[...], w1_ref[...], preferred_element_type=jnp.float32)
    h = jnp.maximum(h + b1_ref[...], 0.0)                       # bias + ReLU on VPU (f32)
    y = jnp.dot(h, w2_ref[...], preferred_element_type=jnp.float32)
    out_ref[...] = y + b2_ref[...]


def pad_irisnet_params(w1, b1, w2, b2):
    """One-time padding of the hidden dim to a multiple of 128.

    Call once at init (weights are constant); the per-call forward then does
    no padding / copying at all. Zero padding is exact: padded hidden units
    get zero bias and zero outgoing weights, so they contribute nothing.
    """
    d_in, hidden = w1.shape
    d_out = w2.shape[1]
    h_p = _round_up(hidden, _LANE)

    w1p = jnp.zeros((d_in, h_p), jnp.float32).at[:, :hidden].set(w1)
    b1p = jnp.zeros((1, h_p), jnp.float32).at[:, :hidden].set(b1.reshape(1, hidden))
    w2p = jnp.zeros((h_p, d_out), jnp.float32).at[:hidden, :].set(w2)
    b2p = jnp.asarray(b2, jnp.float32).reshape(1, d_out)
    return w1p, b1p, w2p, b2p


def irisnet_forward(x, w1p, b1p, w2p, b2p, *, tile_b: int = 1024):
    """x: (B, D_in) f32; padded params from `pad_irisnet_params`.

    Returns (B, D_out) f32. No input/output padding and no trailing slice:
    the batch grid is cdiv-based and Pallas masks the ragged last block's
    stores, so only valid rows are ever written to the output.
    """
    B, d_in = x.shape
    h_p = w1p.shape[1]
    d_out = w2p.shape[1]

    # Batch tile: multiple of 8 sublanes, capped at tile_b rows, and also
    # capped at ~half the batch so the grid has >= 2 steps when possible
    # (lets the "parallel" batch axis use both TensorCores on v7x).
    half = _round_up(max(pl.cdiv(B, 2), 1), _SUBLANE)
    tb = min(_round_up(tile_b, _SUBLANE), half)
    grid = (pl.cdiv(B, tb),)

    return pl.pallas_call(
        _irisnet_kernel,
        out_shape=jax.ShapeDtypeStruct((B, d_out), jnp.float32),
        grid_spec=pltpu.PrefetchScalarGridSpec(
            num_scalar_prefetch=0,
            grid=grid,
            in_specs=[
                # Activation stream: one batch tile per grid step (pipelined).
                # Last dim == full array dim (d_in) -> no 128-lane padding.
                pl.BlockSpec((tb, d_in), lambda i: (i, 0)),
                # Weights/biases: same block every step -> VMEM-resident.
                pl.BlockSpec((d_in, h_p), lambda i: (0, 0)),
                pl.BlockSpec((1, h_p), lambda i: (0, 0)),
                pl.BlockSpec((h_p, d_out), lambda i: (0, 0)),
                pl.BlockSpec((1, d_out), lambda i: (0, 0)),
            ],
            # Output kept at true D_out (full-dim exception); ragged last
            # batch block is write-masked by Pallas.
            out_specs=pl.BlockSpec((tb, d_out), lambda i: (i, 0)),
        ),
        compiler_params=pltpu.CompilerParams(
            dimension_semantics=("parallel",),  # batch-parallel (2 TCs on v7x)
        ),
    )(x, w1p, b1p, w2p, b2p)


def init_irisnet_params(key, input_dim, hidden_dim, output_dim=3):
    """Deterministic init mimicking nn.Linear default U(-1/sqrt(fan_in), +)."""
    k1, k2, k3, k4 = jax.random.split(key, 4)
    bound1 = 1.0 / jnp.sqrt(input_dim)
    bound2 = 1.0 / jnp.sqrt(hidden_dim)
    # Stored as (in_features, out_features) so the kernel computes x @ W.
    w1 = jax.random.uniform(k1, (input_dim, hidden_dim), jnp.float32, -bound1, bound1)
    b1 = jax.random.uniform(k2, (1, hidden_dim), jnp.float32, -bound1, bound1)
    w2 = jax.random.uniform(k3, (hidden_dim, output_dim), jnp.float32, -bound2, bound2)
    b2 = jax.random.uniform(k4, (1, output_dim), jnp.float32, -bound2, bound2)
    return w1, b1, w2, b2


def _reference(x, w1, b1, w2, b2):
    return jnp.maximum(x @ w1 + b1, 0.0) @ w2 + b2


if __name__ == "__main__":
    # Iris-like dims: 4 input features, 3 classes, small hidden.
    input_dim, hidden_dim, output_dim = 4, 32, 3

    key = jax.random.PRNGKey(0)
    kx1, kx2, kp = jax.random.split(key, 3)
    w1, b1, w2, b2 = init_irisnet_params(kp, input_dim, hidden_dim, output_dim)

    # One-time (hoisted) padding of the constant params.
    w1p, b1p, w2p, b2p = pad_irisnet_params(w1, b1, w2, b2)

    # 1) Small iris-sized batch (single grid step).
    x_small = jax.random.normal(kx1, (8, input_dim), dtype=jnp.float32)
    out_small = jax.block_until_ready(irisnet_forward(x_small, w1p, b1p, w2p, b2p))
    ref_small = _reference(x_small, w1, b1, w2, b2)
    assert out_small.shape == (8, output_dim)
    assert jnp.allclose(out_small, ref_small, atol=1e-5, rtol=1e-5)

    # 2) Larger, non-multiple batch to exercise the cdiv grid + ragged last
    #    block (this is the regime the kernel is tuned for).
    x_big = jax.random.normal(kx2, (1000, input_dim), dtype=jnp.float32)
    out_big = jax.block_until_ready(irisnet_forward(x_big, w1p, b1p, w2p, b2p))
    ref_big = _reference(x_big, w1, b1, w2, b2)
    assert out_big.shape == (1000, output_dim)
    assert jnp.allclose(out_big, ref_big, atol=1e-4, rtol=1e-4)

    print("KERNEL_OK")
</pallas_src>

<mosaic_0001>
module attributes {stable_mosaic.version = 11 : i64} {
  func.func @_irisnet_kernel(%arg0: i32, %arg1: memref<8x4xf32, #tpu.memory_space<vmem>>, %arg2: memref<4x128xf32, #tpu.memory_space<vmem>>, %arg3: memref<1x128xf32, #tpu.memory_space<vmem>>, %arg4: memref<128x3xf32, #tpu.memory_space<vmem>>, %arg5: memref<1x3xf32, #tpu.memory_space<vmem>>, %arg6: memref<8x3xf32, #tpu.memory_space<vmem>>) attributes {dimension_semantics = [#tpu.dimension_semantics<parallel>], iteration_bounds = array<i64: 1>, scalar_prefetch = 0 : i64, scratch_operands = 0 : i64, tpu.core_type = #tpu.core_type<tc>, window_params = [{transform_indices = @transform_0, window_bounds = array<i64: 8, 4>}, {pipeline_mode = #tpu.pipeline_mode<synchronous>, transform_indices = @transform_1, window_bounds = array<i64: 4, 128>}, {pipeline_mode = #tpu.pipeline_mode<synchronous>, transform_indices = @transform_2, window_bounds = array<i64: 1, 128>}, {pipeline_mode = #tpu.pipeline_mode<synchronous>, transform_indices = @transform_3, window_bounds = array<i64: 128, 3>}, {pipeline_mode = #tpu.pipeline_mode<synchronous>, transform_indices = @transform_4, window_bounds = array<i64: 1, 3>}, {transform_indices = @transform_5, window_bounds = array<i64: 8, 3>}]} {
    %c0 = arith.constant 0 : index
    %c0_0 = arith.constant 0 : index
    %0 = vector.load %arg1[%c0, %c0_0] : memref<8x4xf32, #tpu.memory_space<vmem>>, vector<8x4xf32>
    %c0_1 = arith.constant 0 : index
    %c0_2 = arith.constant 0 : index
    %1 = vector.load %arg2[%c0_1, %c0_2] : memref<4x128xf32, #tpu.memory_space<vmem>>, vector<4x128xf32>
    %cst = arith.constant dense<0.000000e+00> : vector<8x128xf32>
    %2 = tpu.matmul %0, %1, %cst {dimension_numbers = #tpu.dot_dimension_numbers<[1], [0], [0], [1], [0, 0, 1, 1], [], []>} : vector<8x4xf32>, vector<4x128xf32>, vector<8x128xf32> -> vector<8x128xf32>
    %c0_3 = arith.constant 0 : index
    %c0_4 = arith.constant 0 : index
    %3 = vector.load %arg3[%c0_3, %c0_4] : memref<1x128xf32, #tpu.memory_space<vmem>>, vector<1x128xf32>
    %4 = vector.broadcast %3 : vector<1x128xf32> to vector<8x128xf32>
    %5 = arith.addf %2, %4 : vector<8x128xf32>
    %cst_5 = arith.constant 0.000000e+00 : f32
    %6 = vector.broadcast %cst_5 : f32 to vector<8x128xf32>
    %7 = arith.maximumf %5, %6 : vector<8x128xf32>
    %c0_6 = arith.constant 0 : index
    %c0_7 = arith.constant 0 : index
    %8 = vector.load %arg4[%c0_6, %c0_7] : memref<128x3xf32, #tpu.memory_space<vmem>>, vector<128x3xf32>
    %cst_8 = arith.constant dense<0.000000e+00> : vector<8x3xf32>
    %9 = tpu.matmul %7, %8, %cst_8 {dimension_numbers = #tpu.dot_dimension_numbers<[1], [0], [0], [1], [0, 0, 1, 1], [], []>} : vector<8x128xf32>, vector<128x3xf32>, vector<8x3xf32> -> vector<8x3xf32>
    %c0_9 = arith.constant 0 : index
    %c0_10 = arith.constant 0 : index
    %10 = vector.load %arg5[%c0_9, %c0_10] : memref<1x3xf32, #tpu.memory_space<vmem>>, vector<1x3xf32>
    %11 = vector.broadcast %10 : vector<1x3xf32> to vector<8x3xf32>
    %12 = arith.addf %9, %11 : vector<8x3xf32>
    %c0_11 = arith.constant 0 : index
    %c0_12 = arith.constant 0 : index
    %13 = vector.load %arg6[%c0_11, %c0_12] : memref<8x3xf32, #tpu.memory_space<vmem>>, vector<8x3xf32>
    tpu.vector_store %arg6[%c0_11, %c0_12], %12 {strides = array<i32>} : memref<8x3xf32, #tpu.memory_space<vmem>>, vector<8x3xf32>,
    return
  }
  func.func @transform_0(%arg0: i32) -> (i32, i32) {
    %c0_i32 = arith.constant 0 : i32
    %c0_i32_0 = arith.constant 0 : i32
    return %arg0, %c0_i32 : i32, i32
  }
  func.func @transform_1(%arg0: i32) -> (i32, i32) {
    %c0_i32 = arith.constant 0 : i32
    %c0_i32_0 = arith.constant 0 : i32
    %c0_i32_1 = arith.constant 0 : i32
    return %c0_i32, %c0_i32_0 : i32, i32
  }
  func.func @transform_2(%arg0: i32) -> (i32, i32) {
    %c0_i32 = arith.constant 0 : i32
    %c0_i32_0 = arith.constant 0 : i32
    %c0_i32_1 = arith.constant 0 : i32
    return %c0_i32, %c0_i32_0 : i32, i32
  }
  func.func @transform_3(%arg0: i32) -> (i32, i32) {
    %c0_i32 = arith.constant 0 : i32
    %c0_i32_0 = arith.constant 0 : i32
    %c0_i32_1 = arith.constant 0 : i32
    return %c0_i32, %c0_i32_0 : i32, i32
  }
  func.func @transform_4(%arg0: i32) -> (i32, i32) {
    %c0_i32 = arith.constant 0 : i32
    %c0_i32_0 = arith.constant 0 : i32
    %c0_i32_1 = arith.constant 0 : i32
    return %c0_i32, %c0_i32_0 : i32, i32
  }
  func.func @transform_5(%arg0: i32) -> (i32, i32) {
    %c0_i32 = arith.constant 0 : i32
    %c0_i32_0 = arith.constant 0 : i32
    return %arg0, %c0_i32 : i32, i32
  }
}

</mosaic_0001>

<llo_original>
// kernel: tpu_custom_call.1
$region0: #{tpu_custom_call.1}
  #allocation0 [shape = 'u32[]', space=smem, size = 0x4, offset = 0x4, fixed_abs, tag = 'smem constant byte address 0x4 - core index']
  #allocation1 [shape = 'u32[144,128]{1,0:T(1,128)}', space=vmem, size = 0x12000, scoped, tag = 'internal scratch']
  %s0 = inlined_call_operand.vmem [shape: f32[8,4], index: 0, kind: input, shape index: {}]
  %s1 = inlined_call_operand.vmem [shape: f32[4,128], index: 1, kind: input, shape index: {}]
  %s2 = inlined_call_operand.vmem [shape: f32[1,128], index: 2, kind: input, shape index: {}]
  %s3 = inlined_call_operand.vmem [shape: f32[128,3], index: 3, kind: input, shape index: {}]
  %s4 = inlined_call_operand.vmem [shape: f32[1,3], index: 4, kind: input, shape index: {}]
  %s5 = inlined_call_operand.vmem [shape: f32[8,3], index: 5, kind: output, shape index: {}]
  %s6 = sld [smem:[#allocation0]]
  $region30: #{tpu_custom_call.1} parent=0
    _
  %s8 = ssub.s32 1, %s6
  %s9 = scalar_select 0, %s8, %s6
  // Predicated region
  $region2: #{tpu_custom_call.1} parent=0 // pred_check
    _
  $region3: #{tpu_custom_call.1} parent=0 // pred_check_branch
    %11 = sbr.rel (0) target = $region5
  $region4: #{tpu_custom_call.1} parent=0 // pred_region
    _
  $region5: #{tpu_custom_call.1} parent=0 // pred_fallthru
    _
  // Predicated region
  $region6: #{tpu_custom_call.1} parent=0 // pred_check
    _
  $region7: #{tpu_custom_call.1} parent=0 // pred_check_branch
    %13 = sbr.rel (0) target = $region9
  $region8: #{tpu_custom_call.1} parent=0 // pred_region
    _
  $region9: #{tpu_custom_call.1} parent=0 // pred_fallthru
    _
  // Predicated region
  $region10: #{tpu_custom_call.1} parent=0 // pred_check
    _
  $region11: #{tpu_custom_call.1} parent=0 // pred_check_branch
    %15 = sbr.rel (0) target = $region13
  $region12: #{tpu_custom_call.1} parent=0 // pred_region
    _
  $region13: #{tpu_custom_call.1} parent=0 // pred_fallthru
    _
  // Predicated region
  $region14: #{tpu_custom_call.1} parent=0 // pred_check
    _
  $region15: #{tpu_custom_call.1} parent=0 // pred_check_branch
    %17 = sbr.rel (0) target = $region17
  $region16: #{tpu_custom_call.1} parent=0 // pred_region
    _
  $region17: #{tpu_custom_call.1} parent=0 // pred_fallthru
    _
  // Predicated region
  $region18: #{tpu_custom_call.1} parent=0 // pred_check
    _
  $region19: #{tpu_custom_call.1} parent=0 // pred_check_branch
    %19 = sbr.rel (0) target = $region21
  $region20: #{tpu_custom_call.1} parent=0 // pred_region
    _
  $region21: #{tpu_custom_call.1} parent=0 // pred_fallthru
    _
  %v20 = vld [vmem:[%s0] sm:$0xff]
  %v21 = vld [vmem:[%s1] sm:$0xf]
  %v22 = vld [vmem:[%s2] sm:$0x1]
  %v24 = vlaneseq
  %v25 = vshrl.u32 %v24, 7
  %v26 = vsub.s32 0, %v25
  %v27 = vrot.slane %v22, %v26
  %vm29 = vcmask 31744
  %v31 = vsel %vm29, %v20, 0
  %vm33 = vcmask 1043456
  %v35 = vsel %vm33, %v21, 0
  %37 = vmatprep.subr.mxu0 0.0
  %38 = vmatpush1.msra.mxu0 0.0
  %39 = vmatprep.subr.mxu0 0.0
  %40 = vmatpush1.msra.mxu0 0.0
  %41 = vmatprep.subr.mxu0 0.0
  %42 = vmatpush1.msra.mxu0 0.0
  %43 = vmatprep.subr.mxu0 0.0
  %44 = vmatpush1.msra.mxu0 0.0
  %45 = vmatprep.subr.mxu0 0.0
  %46 = vmatpush1.msra.mxu0 0.0
  %47 = vmatprep.subr.mxu0 0.0
  %48 = vmatpush1.msra.mxu0 0.0
  %49 = vmatprep.subr.mxu0 0.0
  %50 = vmatpush1.msra.mxu0 0.0
  %51 = vmatprep.subr.mxu0 0.0
  %52 = vmatpush1.msra.mxu0 0.0
  %53 = vmatprep.subr.mxu0 0.0
  %54 = vmatpush1.msra.mxu0 0.0
  %55 = vmatprep.subr.mxu0 0.0
  %56 = vmatpush1.msra.mxu0 0.0
  %57 = vmatprep.subr.mxu0 0.0
  %58 = vmatpush1.msra.mxu0 0.0
  %59 = vmatprep.subr.mxu0 0.0
  %60 = vmatpush1.msra.mxu0 0.0
  %61 = vmatprep.subr.mxu0 0.0
  %62 = vmatpush1.msra.mxu0 0.0
  %63 = vmatprep.subr.mxu0 0.0
  %64 = vmatpush1.msra.mxu0 0.0
  %65 = vmatprep.subr.mxu0 0.0
  %66 = vmatpush1.msra.mxu0 0.0
  %67 = vmatprep.subr.mxu0 0.0
  %68 = vmatpush1.msra.mxu0 %v35
  %69 = vmatprep.subr.mxu0 0.0
  %70 = vmatpush2.msra.mxu0 0.0
  %71 = vmatprep.subr.mxu0 0.0
  %72 = vmatpush2.msra.mxu0 0.0
  %73 = vmatprep.subr.mxu0 0.0
  %74 = vmatpush2.msra.mxu0 0.0
  %75 = vmatprep.subr.mxu0 0.0
  %76 = vmatpush2.msra.mxu0 0.0
  %77 = vmatprep.subr.mxu0 0.0
  %78 = vmatpush2.msra.mxu0 0.0
  %79 = vmatprep.subr.mxu0 0.0
  %80 = vmatpush2.msra.mxu0 0.0
  %81 = vmatprep.subr.mxu0 0.0
  %82 = vmatpush2.msra.mxu0 0.0
  %83 = vmatprep.subr.mxu0 0.0
  %84 = vmatpush2.msra.mxu0 0.0
  %85 = vmatprep.subr.mxu0 0.0
  %86 = vmatpush2.msra.mxu0 0.0
  %87 = vmatprep.subr.mxu0 0.0
  %88 = vmatpush2.msra.mxu0 0.0
  %89 = vmatprep.subr.mxu0 0.0
  %90 = vmatpush2.msra.mxu0 0.0
  %91 = vmatprep.subr.mxu0 0.0
  %92 = vmatpush2.msra.mxu0 0.0
  %93 = vmatprep.subr.mxu0 0.0
  %94 = vmatpush2.msra.mxu0 0.0
  %95 = vmatprep.subr.mxu0 0.0
  %96 = vmatpush2.msra.mxu0 0.0
  %97 = vmatprep.subr.mxu0 0.0
  %98 = vmatpush2.msra.mxu0 0.0
  %99 = vmatprep.subr.mxu0 0.0
  %100 = vmatpush2.msra.mxu0 0.0
  %101 = vmatprep.mubr.f32.mxu0 0.0
  %102 = vmatmul.mubr.f32.gmra.mxu0 %v31
  %v103 = vpop.f32.mrf.mxu0
  %v104 = vadd.f32 %v27, %v103
  %v105 = vpop.f32.mrf.mxu0
  %106 = vdwg.mxu0
  %v107 = vmax.f32 %v104, 0.0
  %v108 = vld [vmem:[%s3] sm:$0xff]
  %v109 = vld [vmem:[%s3 + $0x8] sm:$0xff]
  %v110 = vld [vmem:[%s3 + $0x10] sm:$0xff]
  %v111 = vld [vmem:[%s3 + $0x18] sm:$0xff]
  %v112 = vld [vmem:[%s3 + $0x20] sm:$0xff]
  %v113 = vld [vmem:[%s3 + $0x28] sm:$0xff]
  %v114 = vld [vmem:[%s3 + $0x30] sm:$0xff]
  %v115 = vld [vmem:[%s3 + $0x38] sm:$0xff]
  %v116 = vld [vmem:[%s3 + $0x40] sm:$0xff]
  %v117 = vld [vmem:[%s3 + $0x48] sm:$0xff]
  %v118 = vld [vmem:[%s3 + $0x50] sm:$0xff]
  %v119 = vld [vmem:[%s3 + $0x58] sm:$0xff]
  %v120 = vld [vmem:[%s3 + $0x60] sm:$0xff]
  %v121 = vld [vmem:[%s3 + $0x68] sm:$0xff]
  %v122 = vld [vmem:[%s3 + $0x70] sm:$0xff]
  %v123 = vld [vmem:[%s3 + $0x78] sm:$0xff]
  %v124 = vld [vmem:[%s4] sm:$0x1]
  %v126 = vlaneseq
  %v127 = vshrl.u32 %v126, 7
  %v128 = vsub.s32 0, %v127
  %v129 = vrot.slane %v124, %v128
  %131 = vmatprep.subr.mxu0 0.0
  %132 = vmatpush1.msra.mxu0 %v123
  %133 = vmatprep.subr.mxu0 0.0
  %134 = vmatpush1.msra.mxu0 %v122
  %135 = vmatprep.subr.mxu0 0.0
  %136 = vmatpush1.msra.mxu0 %v121
  %137 = vmatprep.subr.mxu0 0.0
  %138 = vmatpush1.msra.mxu0 %v120
  %139 = vmatprep.subr.mxu0 0.0
  %140 = vmatpush1.msra.mxu0 %v119
  %141 = vmatprep.subr.mxu0 0.0
  %142 = vmatpush1.msra.mxu0 %v118
  %143 = vmatprep.subr.mxu0 0.0
  %144 = vmatpush1.msra.mxu0 %v117
  %145 = vmatprep.subr.mxu0 0.0
  %146 = vmatpush1.msra.mxu0 %v116
  %147 = vmatprep.subr.mxu0 0.0
  %148 = vmatpush1.msra.mxu0 %v115
  %149 = vmatprep.subr.mxu0 0.0
  %150 = vmatpush1.msra.mxu0 %v114
  %151 = vmatprep.subr.mxu0 0.0
  %152 = vmatpush1.msra.mxu0 %v113
  %153 = vmatprep.subr.mxu0 0.0
  %154 = vmatpush1.msra.mxu0 %v112
  %155 = vmatprep.subr.mxu0 0.0
  %156 = vmatpush1.msra.mxu0 %v111
  %157 = vmatprep.subr.mxu0 0.0
  %158 = vmatpush1.msra.mxu0 %v110
  %159 = vmatprep.subr.mxu0 0.0
  %160 = vmatpush1.msra.mxu0 %v109
  %161 = vmatprep.subr.mxu0 0.0
  %162 = vmatpush1.msra.mxu0 %v108
  %163 = vmatprep.subr.mxu0 0.0
  %164 = vmatpush2.msra.mxu0 0.0
  %165 = vmatprep.subr.mxu0 0.0
  %166 = vmatpush2.msra.mxu0 0.0
  %167 = vmatprep.subr.mxu0 0.0
  %168 = vmatpush2.msra.mxu0 0.0
  %169 = vmatprep.subr.mxu0 0.0
  %170 = vmatpush2.msra.mxu0 0.0
  %171 = vmatprep.subr.mxu0 0.0
  %172 = vmatpush2.msra.mxu0 0.0
  %173 = vmatprep.subr.mxu0 0.0
  %174 = vmatpush2.msra.mxu0 0.0
  %175 = vmatprep.subr.mxu0 0.0
  %176 = vmatpush2.msra.mxu0 0.0
  %177 = vmatprep.subr.mxu0 0.0
  %178 = vmatpush2.msra.mxu0 0.0
  %179 = vmatprep.subr.mxu0 0.0
  %180 = vmatpush2.msra.mxu0 0.0
  %181 = vmatprep.subr.mxu0 0.0
  %182 = vmatpush2.msra.mxu0 0.0
  %183 = vmatprep.subr.mxu0 0.0
  %184 = vmatpush2.msra.mxu0 0.0
  %185 = vmatprep.subr.mxu0 0.0
  %186 = vmatpush2.msra.mxu0 0.0
  %187 = vmatprep.subr.mxu0 0.0
  %188 = vmatpush2.msra.mxu0 0.0
  %189 = vmatprep.subr.mxu0 0.0
  %190 = vmatpush2.msra.mxu0 0.0
  %191 = vmatprep.subr.mxu0 0.0
  %192 = vmatpush2.msra.mxu0 0.0
  %193 = vmatprep.subr.mxu0 0.0
  %194 = vmatpush2.msra.mxu0 0.0
  %195 = vmatprep.mubr.f32.mxu0 0.0
  %196 = vmatmul.mubr.f32.gmra.mxu0 %v107
  %v197 = vpop.f32.mrf.mxu0
  %v198 = vadd.f32 %v129, %v197
  %v199 = vpop.f32.mrf.mxu0
  %200 = vdwg.mxu0
  %vm201 = vcmask 23552
  %202 = vst.msk [vmem:[%s5] sm:$0xff] %vm201, %v198
  // Predicated region
  $region22: #{tpu_custom_call.1} parent=0 // pred_check
    _
  $region23: #{tpu_custom_call.1} parent=0 // pred_check_branch
    %204 = sbr.rel (0) target = $region25
  $region24: #{tpu_custom_call.1} parent=0 // pred_region
    _
  $region25: #{tpu_custom_call.1} parent=0 // pred_fallthru
    _
  // Predicated region
  $region26: #{tpu_custom_call.1} parent=0 // pred_check
    _
  $region27: #{tpu_custom_call.1} parent=0 // pred_check_branch
    %206 = sbr.rel (0) target = $region29
  $region28: #{tpu_custom_call.1} parent=0 // pred_region
    _
  $region29: #{tpu_custom_call.1} parent=0 // pred_fallthru
    _

</llo_original>
